<compile_context>
chip_gen: v5e
topology: v5e:2x2
jax: 0.10.0
libtpu: 0.0.40
codegen_flags: <defaults>
</compile_context>

<pallas_src>
import jax
import jax.numpy as jnp
from jax.experimental import pallas as pl
from jax.experimental.pallas import tpu as pltpu

_TB_MAX = 1024   # hard cap on batch rows per grid step


def _round_up(x, m):
    return ((x + m - 1) // m) * m


def _vmem_budget_bytes():
    """Per-generation VMEM budget (75% of detected capacity, 48 MiB fallback)."""
    cap = None
    try:
        info = pltpu.get_tpu_info()
        for name in ("vmem_capacity_bytes", "vmem_size_bytes", "vmem_bytes"):
            cap = getattr(info, name, None)
            if cap:
                break
    except Exception:
        cap = None
    if not cap:
        cap = 64 * 1024 * 1024          # conservative: v7x per-TensorCore VMEM
    return int(cap) * 3 // 4


def _choose_tb(B, M, H, R, in_bytes, w_bytes, out_bytes, vmem_budget):
    """Pick the batch tile from a VMEM footprint model."""
    # Per-row bytes: double-buffered x tiles + double-buffered out tile
    # + f32 emb/gate intermediates (~2 live copies).
    per_row = 2 * M * in_bytes + 2 * H * out_bytes + 2 * H * 4
    # Weights + bias; counted double-buffered to stay safe even if the
    # single-buffer (pl.Buffered(1)) request is not honored by this build.
    fixed = 2 * (M * H * w_bytes + 2 * H * R * 4 + H * 4)
    tb = (vmem_budget - fixed) // max(per_row, 1)
    tb = max(8, min(int(tb), _TB_MAX))
    # Keep >= 2 grid steps when possible so the "parallel" batch axis can be
    # sharded across both v7x TensorCores (harmless on 1-TC v5e/v6e).
    tb = min(tb, _round_up(-(-B // 2), 8))
    if tb >= B:
        return B                         # full-dim block is always legal
    return max(8, (tb // 8) * 8)         # partial blocks: multiple of 8


def _make_kernel(n_inputs, compute_dtype):
    def kernel(*refs):
        # refs layout: x_0..x_{n-1}, Wf_0..Wf_{n-1}, bias, Wsq, Wex, out
        x_refs = refs[:n_inputs]
        wf_refs = refs[n_inputs:2 * n_inputs]
        bf_ref, wsq_ref, wex_ref, o_ref = refs[2 * n_inputs:]

        # Fused concat + fusion Linear: emb = sum_i x_i @ Wf_i + bf (f32 accum).
        # Inputs are cast to the matmul dtype AFTER the block load (no
        # wrapper-side HBM cast pass).
        emb = jnp.dot(x_refs[0][...].astype(compute_dtype), wf_refs[0][...],
                      preferred_element_type=jnp.float32)
        for i in range(1, n_inputs):
            emb = emb + jnp.dot(x_refs[i][...].astype(compute_dtype),
                                wf_refs[i][...],
                                preferred_element_type=jnp.float32)
        emb = emb + bf_ref[...]                       # f32 bias broadcast

        # SE gate, f32 end-to-end (tiny matmuls, no VPU cast passes).
        g = jnp.dot(emb, wsq_ref[...], preferred_element_type=jnp.float32)
        g = jnp.maximum(g, 0.0)
        g = jnp.dot(g, wex_ref[...], preferred_element_type=jnp.float32)
        gate = jax.nn.sigmoid(g)

        o_ref[...] = (emb * gate).astype(o_ref.dtype)

    return kernel


def prepare_concat_dense_se_params(w_fusion, b_fusion, w_squeeze, w_excite,
                                   input_dims, compute_dtype=jnp.bfloat16,
                                   out_dtype=jnp.bfloat16):
    """One-time parameter prep (NOT in the per-call path):
    transpose to [in, out], split the fusion weight along the concat axis,
    cast fusion-matmul operands to `compute_dtype`; bias + SE weights stay f32."""
    H, M = w_fusion.shape
    R = w_squeeze.shape[0]
    assert sum(input_dims) == M, "input_dims must sum to multimodal_hidden_size"
    assert w_squeeze.shape == (R, H) and w_excite.shape == (H, R)

    wf_t = jnp.transpose(w_fusion)                                    # [M, H]
    offs = [0]
    for d in input_dims:
        offs.append(offs[-1] + int(d))
    wf_parts = tuple(
        wf_t[offs[i]:offs[i + 1]].astype(compute_dtype)               # [D_i, H]
        for i in range(len(input_dims)))

    return {
        "wf_parts": wf_parts,
        "bf": b_fusion.astype(jnp.float32).reshape(1, H),             # [1, H] f32
        "wsq": jnp.transpose(w_squeeze).astype(jnp.float32),          # [H, R] f32
        "wex": jnp.transpose(w_excite).astype(jnp.float32),           # [R, H] f32
        "H": H, "R": R,
        "input_dims": tuple(int(d) for d in input_dims),
        "compute_dtype": compute_dtype,
        "out_dtype": out_dtype,
    }


def concat_dense_se(params, inputs):
    """inputs: list of [B, d_i] arrays (d_i matching params['input_dims']).
    Inputs may be f32 or bf16; they are cast in-kernel, not in the wrapper."""
    dims = params["input_dims"]
    assert len(inputs) == len(dims)
    B = inputs[0].shape[0]
    H, R = params["H"], params["R"]
    M = sum(dims)
    cdt = params["compute_dtype"]
    odt = params["out_dtype"]

    in_bytes = max(jnp.dtype(x.dtype).itemsize for x in inputs)
    w_bytes = jnp.dtype(cdt).itemsize
    out_bytes = jnp.dtype(odt).itemsize

    vmem_budget = _vmem_budget_bytes()
    TB = _choose_tb(B, M, H, R, in_bytes, w_bytes, out_bytes, vmem_budget)
    grid = (pl.cdiv(B, TB),)

    def run(single_buffer_weights):
        def resident(shape):
            # Weights/bias never change block index; single-buffer when possible.
            if single_buffer_weights:
                return pl.BlockSpec(shape, lambda i: (0, 0),
                                    pipeline_mode=pl.Buffered(1))
            return pl.BlockSpec(shape, lambda i: (0, 0))

        x_specs = [pl.BlockSpec((TB, d), lambda i: (i, 0)) for d in dims]
        wf_specs = [resident((d, H)) for d in dims]
        const_specs = [resident((1, H)),     # fusion bias (f32)
                       resident((H, R)),     # squeeze weight (f32)
                       resident((R, H))]     # excitation weight (f32)

        return pl.pallas_call(
            _make_kernel(len(inputs), cdt),
            out_shape=jax.ShapeDtypeStruct((B, H), odt),
            grid=grid,
            in_specs=x_specs + wf_specs + const_specs,
            out_specs=pl.BlockSpec((TB, H), lambda i: (i, 0)),
            compiler_params=pltpu.CompilerParams(
                dimension_semantics=("parallel",),   # 2-TC sharding on v7x
                vmem_limit_bytes=vmem_budget,
            ),
        )(*inputs, *params["wf_parts"], params["bf"], params["wsq"], params["wex"])

    try:
        # Preferred: single-buffered resident weights (saves VMEM for larger TB).
        return run(True)
    except Exception:
        # pl.Buffered(1) / pipeline_mode not supported by this build -> default
        # double-buffering (still within the VMEM budget, which counts weights 2x).
        return run(False)


def _reference(inputs, w_fusion, b_fusion, w_squeeze, w_excite):
    x = jnp.concatenate(inputs, axis=1).astype(jnp.float32)
    emb = x @ w_fusion.T + b_fusion
    g = jnp.maximum(emb @ w_squeeze.T, 0.0)
    gate = jax.nn.sigmoid(g @ w_excite.T)
    return emb * gate


if __name__ == "__main__":
    # Module config (small): multimodal_hidden_size=64 (two 32-dim inputs),
    # hidden_size=32, se_ratio=8, dropout=0.1 (eval mode -> identity).
    B = 8
    D1, D2 = 32, 32
    M = D1 + D2
    H = 32
    SE_RATIO = 8
    R = H // SE_RATIO    # 4

    key = jax.random.PRNGKey(0)
    k0, k1, k2, k3, k4, k5 = jax.random.split(key, 6)

    # PyTorch nn.Linear layout: weight [out, in]
    w_fusion = jax.random.normal(k0, (H, M), jnp.float32) * 0.1
    b_fusion = jax.random.normal(k1, (H,), jnp.float32) * 0.1
    w_squeeze = jax.random.normal(k2, (R, H), jnp.float32) * 0.1
    w_excite = jax.random.normal(k3, (H, R), jnp.float32) * 0.1

    x1 = jax.random.normal(k4, (B, D1), jnp.float32)
    x2 = jax.random.normal(k5, (B, D2), jnp.float32)
    inputs = [x1, x2]

    ref = _reference(inputs, w_fusion, b_fusion, w_squeeze, w_excite)

    # Production path: bf16 matmul operands + bf16 output (loose tolerance vs f32 ref).
    params_bf16 = prepare_concat_dense_se_params(
        w_fusion, b_fusion, w_squeeze, w_excite, input_dims=(D1, D2),
        compute_dtype=jnp.bfloat16, out_dtype=jnp.bfloat16)
    out = jax.block_until_ready(concat_dense_se(params_bf16, inputs))
    assert out.shape == (B, H) and out.dtype == jnp.bfloat16
    assert jnp.allclose(out.astype(jnp.float32), ref, atol=5e-2, rtol=5e-2), \
        "mismatch (bf16 path)"

    # f32 operand/output path -- tight structural correctness check.
    params_f32 = prepare_concat_dense_se_params(
        w_fusion, b_fusion, w_squeeze, w_excite, input_dims=(D1, D2),
        compute_dtype=jnp.float32, out_dtype=jnp.float32)
    out_f32 = jax.block_until_ready(concat_dense_se(params_f32, inputs))
    assert jnp.allclose(out_f32, ref, atol=1e-4, rtol=1e-4), "mismatch (f32 path)"

    print("KERNEL_OK")
</pallas_src>

<mosaic_0001>
module attributes {stable_mosaic.version = 11 : i64} {
  func.func @kernel(%arg0: i32, %arg1: memref<8x32xf32, #tpu.memory_space<vmem>>, %arg2: memref<8x32xf32, #tpu.memory_space<vmem>>, %arg3: memref<32x32xbf16, #tpu.memory_space<vmem>>, %arg4: memref<32x32xbf16, #tpu.memory_space<vmem>>, %arg5: memref<1x32xf32, #tpu.memory_space<vmem>>, %arg6: memref<32x4xf32, #tpu.memory_space<vmem>>, %arg7: memref<4x32xf32, #tpu.memory_space<vmem>>, %arg8: memref<8x32xbf16, #tpu.memory_space<vmem>>) attributes {dimension_semantics = [#tpu.dimension_semantics<parallel>], iteration_bounds = array<i64: 1>, scalar_prefetch = 0 : i64, scratch_operands = 0 : i64, tpu.core_type = #tpu.core_type<tc>, window_params = [{transform_indices = @transform_0, window_bounds = array<i64: 8, 32>}, {transform_indices = @transform_1, window_bounds = array<i64: 8, 32>}, {pipeline_mode = #tpu.pipeline_mode<synchronous>, transform_indices = @transform_2, window_bounds = array<i64: 32, 32>}, {pipeline_mode = #tpu.pipeline_mode<synchronous>, transform_indices = @transform_3, window_bounds = array<i64: 32, 32>}, {pipeline_mode = #tpu.pipeline_mode<synchronous>, transform_indices = @transform_4, window_bounds = array<i64: 1, 32>}, {pipeline_mode = #tpu.pipeline_mode<synchronous>, transform_indices = @transform_5, window_bounds = array<i64: 32, 4>}, {pipeline_mode = #tpu.pipeline_mode<synchronous>, transform_indices = @transform_6, window_bounds = array<i64: 4, 32>}, {transform_indices = @transform_7, window_bounds = array<i64: 8, 32>}]} {
    %c0 = arith.constant 0 : index
    %c0_0 = arith.constant 0 : index
    %0 = vector.load %arg1[%c0, %c0_0] : memref<8x32xf32, #tpu.memory_space<vmem>>, vector<8x32xf32>
    %1 = arith.truncf %0 : vector<8x32xf32> to vector<8x32xbf16>
    %c0_1 = arith.constant 0 : index
    %c0_2 = arith.constant 0 : index
    %2 = vector.load %arg3[%c0_1, %c0_2] : memref<32x32xbf16, #tpu.memory_space<vmem>>, vector<32x32xbf16>
    %cst = arith.constant dense<0.000000e+00> : vector<8x32xf32>
    %3 = tpu.matmul %1, %2, %cst {dimension_numbers = #tpu.dot_dimension_numbers<[1], [0], [0], [1], [0, 0, 1, 1], [], []>} : vector<8x32xbf16>, vector<32x32xbf16>, vector<8x32xf32> -> vector<8x32xf32>
    %c0_3 = arith.constant 0 : index
    %c0_4 = arith.constant 0 : index
    %4 = vector.load %arg2[%c0_3, %c0_4] : memref<8x32xf32, #tpu.memory_space<vmem>>, vector<8x32xf32>
    %5 = arith.truncf %4 : vector<8x32xf32> to vector<8x32xbf16>
    %c0_5 = arith.constant 0 : index
    %c0_6 = arith.constant 0 : index
    %6 = vector.load %arg4[%c0_5, %c0_6] : memref<32x32xbf16, #tpu.memory_space<vmem>>, vector<32x32xbf16>
    %cst_7 = arith.constant dense<0.000000e+00> : vector<8x32xf32>
    %7 = tpu.matmul %5, %6, %cst_7 {dimension_numbers = #tpu.dot_dimension_numbers<[1], [0], [0], [1], [0, 0, 1, 1], [], []>} : vector<8x32xbf16>, vector<32x32xbf16>, vector<8x32xf32> -> vector<8x32xf32>
    %8 = arith.addf %3, %7 : vector<8x32xf32>
    %c0_8 = arith.constant 0 : index
    %c0_9 = arith.constant 0 : index
    %9 = vector.load %arg5[%c0_8, %c0_9] : memref<1x32xf32, #tpu.memory_space<vmem>>, vector<1x32xf32>
    %10 = vector.broadcast %9 : vector<1x32xf32> to vector<8x32xf32>
    %11 = arith.addf %8, %10 : vector<8x32xf32>
    %c0_10 = arith.constant 0 : index
    %c0_11 = arith.constant 0 : index
    %12 = vector.load %arg6[%c0_10, %c0_11] : memref<32x4xf32, #tpu.memory_space<vmem>>, vector<32x4xf32>
    %cst_12 = arith.constant dense<0.000000e+00> : vector<8x4xf32>
    %13 = tpu.matmul %11, %12, %cst_12 {dimension_numbers = #tpu.dot_dimension_numbers<[1], [0], [0], [1], [0, 0, 1, 1], [], []>} : vector<8x32xf32>, vector<32x4xf32>, vector<8x4xf32> -> vector<8x4xf32>
    %cst_13 = arith.constant 0.000000e+00 : f32
    %14 = vector.broadcast %cst_13 : f32 to vector<8x4xf32>
    %15 = arith.maximumf %13, %14 : vector<8x4xf32>
    %c0_14 = arith.constant 0 : index
    %c0_15 = arith.constant 0 : index
    %16 = vector.load %arg7[%c0_14, %c0_15] : memref<4x32xf32, #tpu.memory_space<vmem>>, vector<4x32xf32>
    %cst_16 = arith.constant dense<0.000000e+00> : vector<8x32xf32>
    %17 = tpu.matmul %15, %16, %cst_16 {dimension_numbers = #tpu.dot_dimension_numbers<[1], [0], [0], [1], [0, 0, 1, 1], [], []>} : vector<8x4xf32>, vector<4x32xf32>, vector<8x32xf32> -> vector<8x32xf32>
    %18 = arith.negf %17 : vector<8x32xf32>
    %19 = math.exp %18 : vector<8x32xf32>
    %cst_17 = arith.constant 1.000000e+00 : f32
    %20 = vector.broadcast %cst_17 : f32 to vector<8x32xf32>
    %21 = arith.addf %20, %19 : vector<8x32xf32>
    %22 = arith.divf %20, %21 : vector<8x32xf32>
    %23 = arith.mulf %11, %22 : vector<8x32xf32>
    %24 = arith.truncf %23 : vector<8x32xf32> to vector<8x32xbf16>
    %c0_18 = arith.constant 0 : index
    %c0_19 = arith.constant 0 : index
    %25 = vector.load %arg8[%c0_18, %c0_19] : memref<8x32xbf16, #tpu.memory_space<vmem>>, vector<8x32xbf16>
    tpu.vector_store %arg8[%c0_18, %c0_19], %24 {strides = array<i32>} : memref<8x32xbf16, #tpu.memory_space<vmem>>, vector<8x32xbf16>,
    return
  }
  func.func @transform_0(%arg0: i32) -> (i32, i32) {
    %c0_i32 = arith.constant 0 : i32
    %c0_i32_0 = arith.constant 0 : i32
    return %arg0, %c0_i32 : i32, i32
  }
  func.func @transform_1(%arg0: i32) -> (i32, i32) {
    %c0_i32 = arith.constant 0 : i32
    %c0_i32_0 = arith.constant 0 : i32
    return %arg0, %c0_i32 : i32, i32
  }
  func.func @transform_2(%arg0: i32) -> (i32, i32) {
    %c0_i32 = arith.constant 0 : i32
    %c0_i32_0 = arith.constant 0 : i32
    %c0_i32_1 = arith.constant 0 : i32
    return %c0_i32, %c0_i32_0 : i32, i32
  }
  func.func @transform_3(%arg0: i32) -> (i32, i32) {
    %c0_i32 = arith.constant 0 : i32
    %c0_i32_0 = arith.constant 0 : i32
    %c0_i32_1 = arith.constant 0 : i32
    return %c0_i32, %c0_i32_0 : i32, i32
  }
  func.func @transform_4(%arg0: i32) -> (i32, i32) {
    %c0_i32 = arith.constant 0 : i32
    %c0_i32_0 = arith.constant 0 : i32
    %c0_i32_1 = arith.constant 0 : i32
    return %c0_i32, %c0_i32_0 : i32, i32
  }
  func.func @transform_5(%arg0: i32) -> (i32, i32) {
    %c0_i32 = arith.constant 0 : i32
    %c0_i32_0 = arith.constant 0 : i32
    %c0_i32_1 = arith.constant 0 : i32
    return %c0_i32, %c0_i32_0 : i32, i32
  }
  func.func @transform_6(%arg0: i32) -> (i32, i32) {
    %c0_i32 = arith.constant 0 : i32
    %c0_i32_0 = arith.constant 0 : i32
    %c0_i32_1 = arith.constant 0 : i32
    return %c0_i32, %c0_i32_0 : i32, i32
  }
  func.func @transform_7(%arg0: i32) -> (i32, i32) {
    %c0_i32 = arith.constant 0 : i32
    %c0_i32_0 = arith.constant 0 : i32
    return %arg0, %c0_i32 : i32, i32
  }
}

module attributes {stable_mosaic.version = 11 : i64} {
  func.func @kernel(%arg0: i32, %arg1: memref<8x32xf32, #tpu.memory_space<vmem>>, %arg2: memref<8x32xf32, #tpu.memory_space<vmem>>, %arg3: memref<32x32xbf16, #tpu.memory_space<vmem>>, %arg4: memref<32x32xbf16, #tpu.memory_space<vmem>>, %arg5: memref<1x32xf32, #tpu.memory_space<vmem>>, %arg6: memref<32x4xf32, #tpu.memory_space<vmem>>, %arg7: memref<4x32xf32, #tpu.memory_space<vmem>>, %arg8: memref<8x32xbf16, #tpu.memory_space<vmem>>) attributes {dimension_semantics = [#tpu.dimension_semantics<parallel>], iteration_bounds = array<i64: 1>, scalar_prefetch = 0 : i64, scratch_operands = 0 : i64, tpu.core_type = #tpu.core_type<tc>, window_params = [{transform_indices = @transform_0, window_bounds = array<i64: 8, 32>}, {transform_indices = @transform_1, window_bounds = array<i64: 8, 32>}, {pipeline_mode = #tpu.pipeline_mode<synchronous>, transform_indices = @transform_2, window_bounds = array<i64: 32, 32>}, {pipeline_mode = #tpu.pipeline_mode<synchronous>, transform_indices = @transform_3, window_bounds = array<i64: 32, 32>}, {pipeline_mode = #tpu.pipeline_mode<synchronous>, transform_indices = @transform_4, window_bounds = array<i64: 1, 32>}, {pipeline_mode = #tpu.pipeline_mode<synchronous>, transform_indices = @transform_5, window_bounds = array<i64: 32, 4>}, {pipeline_mode = #tpu.pipeline_mode<synchronous>, transform_indices = @transform_6, window_bounds = array<i64: 4, 32>}, {transform_indices = @transform_7, window_bounds = array<i64: 8, 32>}]} {
    %c0 = arith.constant 0 : index
    %c0_0 = arith.constant 0 : index
    %0 = vector.load %arg1[%c0, %c0_0] : memref<8x32xf32, #tpu.memory_space<vmem>>, vector<8x32xf32>
    %1 = arith.truncf %0 : vector<8x32xf32> to vector<8x32xbf16>
    %c0_1 = arith.constant 0 : index
    %c0_2 = arith.constant 0 : index
    %2 = vector.load %arg3[%c0_1, %c0_2] : memref<32x32xbf16, #tpu.memory_space<vmem>>, vector<32x32xbf16>
    %cst = arith.constant dense<0.000000e+00> : vector<8x32xf32>
    %3 = tpu.matmul %1, %2, %cst {dimension_numbers = #tpu.dot_dimension_numbers<[1], [0], [0], [1], [0, 0, 1, 1], [], []>} : vector<8x32xbf16>, vector<32x32xbf16>, vector<8x32xf32> -> vector<8x32xf32>
    %c0_3 = arith.constant 0 : index
    %c0_4 = arith.constant 0 : index
    %4 = vector.load %arg2[%c0_3, %c0_4] : memref<8x32xf32, #tpu.memory_space<vmem>>, vector<8x32xf32>
    %5 = arith.truncf %4 : vector<8x32xf32> to vector<8x32xbf16>
    %c0_5 = arith.constant 0 : index
    %c0_6 = arith.constant 0 : index
    %6 = vector.load %arg4[%c0_5, %c0_6] : memref<32x32xbf16, #tpu.memory_space<vmem>>, vector<32x32xbf16>
    %cst_7 = arith.constant dense<0.000000e+00> : vector<8x32xf32>
    %7 = tpu.matmul %5, %6, %cst_7 {dimension_numbers = #tpu.dot_dimension_numbers<[1], [0], [0], [1], [0, 0, 1, 1], [], []>} : vector<8x32xbf16>, vector<32x32xbf16>, vector<8x32xf32> -> vector<8x32xf32>
    %8 = arith.addf %3, %7 : vector<8x32xf32>
    %c0_8 = arith.constant 0 : index
    %c0_9 = arith.constant 0 : index
    %9 = vector.load %arg5[%c0_8, %c0_9] : memref<1x32xf32, #tpu.memory_space<vmem>>, vector<1x32xf32>
    %10 = vector.broadcast %9 : vector<1x32xf32> to vector<8x32xf32>
    %11 = arith.addf %8, %10 : vector<8x32xf32>
    %c0_10 = arith.constant 0 : index
    %c0_11 = arith.constant 0 : index
    %12 = vector.load %arg6[%c0_10, %c0_11] : memref<32x4xf32, #tpu.memory_space<vmem>>, vector<32x4xf32>
    %cst_12 = arith.constant dense<0.000000e+00> : vector<8x4xf32>
    %13 = tpu.matmul %11, %12, %cst_12 {dimension_numbers = #tpu.dot_dimension_numbers<[1], [0], [0], [1], [0, 0, 1, 1], [], []>} : vector<8x32xf32>, vector<32x4xf32>, vector<8x4xf32> -> vector<8x4xf32>
    %cst_13 = arith.constant 0.000000e+00 : f32
    %14 = vector.broadcast %cst_13 : f32 to vector<8x4xf32>
    %15 = arith.maximumf %13, %14 : vector<8x4xf32>
    %c0_14 = arith.constant 0 : index
    %c0_15 = arith.constant 0 : index
    %16 = vector.load %arg7[%c0_14, %c0_15] : memref<4x32xf32, #tpu.memory_space<vmem>>, vector<4x32xf32>
    %cst_16 = arith.constant dense<0.000000e+00> : vector<8x32xf32>
    %17 = tpu.matmul %15, %16, %cst_16 {dimension_numbers = #tpu.dot_dimension_numbers<[1], [0], [0], [1], [0, 0, 1, 1], [], []>} : vector<8x4xf32>, vector<4x32xf32>, vector<8x32xf32> -> vector<8x32xf32>
    %18 = arith.negf %17 : vector<8x32xf32>
    %19 = math.exp %18 : vector<8x32xf32>
    %cst_17 = arith.constant 1.000000e+00 : f32
    %20 = vector.broadcast %cst_17 : f32 to vector<8x32xf32>
    %21 = arith.addf %20, %19 : vector<8x32xf32>
    %22 = arith.divf %20, %21 : vector<8x32xf32>
    %23 = arith.mulf %11, %22 : vector<8x32xf32>
    %24 = arith.truncf %23 : vector<8x32xf32> to vector<8x32xbf16>
    %c0_18 = arith.constant 0 : index
    %c0_19 = arith.constant 0 : index
    %25 = vector.load %arg8[%c0_18, %c0_19] : memref<8x32xbf16, #tpu.memory_space<vmem>>, vector<8x32xbf16>
    tpu.vector_store %arg8[%c0_18, %c0_19], %24 {strides = array<i32>} : memref<8x32xbf16, #tpu.memory_space<vmem>>, vector<8x32xbf16>,
    return
  }
  func.func @transform_0(%arg0: i32) -> (i32, i32) {
    %c0_i32 = arith.constant 0 : i32
    %c0_i32_0 = arith.constant 0 : i32
    return %arg0, %c0_i32 : i32, i32
  }
  func.func @transform_1(%arg0: i32) -> (i32, i32) {
    %c0_i32 = arith.constant 0 : i32
    %c0_i32_0 = arith.constant 0 : i32
    return %arg0, %c0_i32 : i32, i32
  }
  func.func @transform_2(%arg0: i32) -> (i32, i32) {
    %c0_i32 = arith.constant 0 : i32
    %c0_i32_0 = arith.constant 0 : i32
    %c0_i32_1 = arith.constant 0 : i32
    return %c0_i32, %c0_i32_0 : i32, i32
  }
  func.func @transform_3(%arg0: i32) -> (i32, i32) {
    %c0_i32 = arith.constant 0 : i32
    %c0_i32_0 = arith.constant 0 : i32
    %c0_i32_1 = arith.constant 0 : i32
    return %c0_i32, %c0_i32_0 : i32, i32
  }
  func.func @transform_4(%arg0: i32) -> (i32, i32) {
    %c0_i32 = arith.constant 0 : i32
    %c0_i32_0 = arith.constant 0 : i32
    %c0_i32_1 = arith.constant 0 : i32
    return %c0_i32, %c0_i32_0 : i32, i32
  }
  func.func @transform_5(%arg0: i32) -> (i32, i32) {
    %c0_i32 = arith.constant 0 : i32
    %c0_i32_0 = arith.constant 0 : i32
    %c0_i32_1 = arith.constant 0 : i32
    return %c0_i32, %c0_i32_0 : i32, i32
  }
  func.func @transform_6(%arg0: i32) -> (i32, i32) {
    %c0_i32 = arith.constant 0 : i32
    %c0_i32_0 = arith.constant 0 : i32
    %c0_i32_1 = arith.constant 0 : i32
    return %c0_i32, %c0_i32_0 : i32, i32
  }
  func.func @transform_7(%arg0: i32) -> (i32, i32) {
    %c0_i32 = arith.constant 0 : i32
    %c0_i32_0 = arith.constant 0 : i32
    return %arg0, %c0_i32 : i32, i32
  }
}

</mosaic_0001>

<llo_original>
// kernel: tpu_custom_call.1
$region0: #{tpu_custom_call.1}
  #allocation0 [shape = 'u32[]', space=smem, size = 0x4, offset = 0x4, fixed_abs, tag = 'smem constant byte address 0x4 - core index']
  #allocation1 [shape = 'u32[72,128]{1,0:T(1,128)}', space=vmem, size = 0x9000, scoped, tag = 'internal scratch']
  %s0 = inlined_call_operand.hbm [shape: f32[8,32], index: 0, kind: input, shape index: {}]
  %s1 = inlined_call_operand.hbm [shape: f32[8,32], index: 1, kind: input, shape index: {}]
  %s2 = inlined_call_operand.vmem [shape: bf16[32,32], index: 2, kind: input, shape index: {}]
  %s3 = inlined_call_operand.vmem [shape: bf16[32,32], index: 3, kind: input, shape index: {}]
  %s4 = inlined_call_operand.hbm [shape: f32[1,32], index: 4, kind: input, shape index: {}]
  %s5 = inlined_call_operand.vmem [shape: f32[32,4], index: 5, kind: input, shape index: {}]
  %s6 = inlined_call_operand.vmem [shape: f32[4,32], index: 6, kind: input, shape index: {}]
  %s7 = inlined_call_operand.hbm [shape: bf16[8,32], index: 7, kind: output, shape index: {}]
  %s8 = sld [smem:[#allocation0]]
  $region50: #{tpu_custom_call.1} parent=0
    _
  %s10 = ssub.s32 1, %s8
  %s11 = scalar_select 0, %s10, %s8
  $region1: #{tpu_custom_call.1} parent=0
    #allocation2 [shape = 'u8[4096]{0}', space=vmem, size = 0x1000, scoped, tag = 'input window, operand 0, single buffered']
    #allocation3 [shape = 's32[1]{0}', space=sflag, size = 0x4, scoped, tag = 'scoped memory for tpu_custom_call.1']
    #allocation4 [shape = 's32[1]{0}', space=sflag, size = 0x4, scoped, tag = 'scoped memory for tpu_custom_call.1']
    #allocation5 [shape = 'u8[4096]{0}', space=vmem, size = 0x1000, scoped, tag = 'input window, operand 1, single buffered']
    #allocation6 [shape = 's32[1]{0}', space=sflag, size = 0x4, scoped, tag = 'scoped memory for tpu_custom_call.1']
    #allocation7 [shape = 'u8[512]{0}', space=vmem, size = 0x400, scoped, tag = 'input window, operand 4, single buffered']
    #allocation8 [shape = 'u8[2048]{0}', space=vmem, size = 0x800, scoped, tag = 'output window, operand 0, single buffered']
    %12 = vsyncpa [#allocation3], 0
    %13 = vsyncpa [#allocation6], 0
    %14 = vsyncpa [#allocation4], 0
    // Predicated region
    $region2: #{tpu_custom_call.1} parent=1 // pred_check
      _
    $region3: #{tpu_custom_call.1} parent=1 // pred_check_branch
      %16 = sbr.rel (0) target = $region5
    $region4: #{tpu_custom_call.1} parent=1 // pred_region
      %18 = vsyncadd [#allocation3], 0
      %s20 = sshll.u32 %s0, 4
      %s21 = int_to_ptr.hbm [resolvable:$true] %s20
      %s22 = sshll.u32 [#allocation2], 4
      %s23 = int_to_ptr.vmem [resolvable:$true] %s22
      %25 = dma.hbm_to_vmem [thread:$0]  %s21, 128, %s23, [#allocation3]
    $region5: #{tpu_custom_call.1} parent=1 // pred_fallthru
      _
    // Predicated region
    $region6: #{tpu_custom_call.1} parent=1 // pred_check
      _
    $region7: #{tpu_custom_call.1} parent=1 // pred_check_branch
      %27 = sbr.rel (0) target = $region9
    $region8: #{tpu_custom_call.1} parent=1 // pred_region
      %29 = vsyncadd [#allocation6], 0
      %s31 = sshll.u32 %s1, 4
      %s32 = int_to_ptr.hbm [resolvable:$true] %s31
      %s33 = sshll.u32 [#allocation5], 4
      %s34 = int_to_ptr.vmem [resolvable:$true] %s33
      %36 = dma.hbm_to_vmem [thread:$0]  %s32, 128, %s34, [#allocation6]
    $region9: #{tpu_custom_call.1} parent=1 // pred_fallthru
      _
    // Predicated region
    $region10: #{tpu_custom_call.1} parent=1 // pred_check
      _
    $region11: #{tpu_custom_call.1} parent=1 // pred_check_branch
      %38 = sbr.rel (0) target = $region13
    $region12: #{tpu_custom_call.1} parent=1 // pred_region
      _
    $region13: #{tpu_custom_call.1} parent=1 // pred_fallthru
      _
    // Predicated region
    $region14: #{tpu_custom_call.1} parent=1 // pred_check
      _
    $region15: #{tpu_custom_call.1} parent=1 // pred_check_branch
      %40 = sbr.rel (0) target = $region17
    $region16: #{tpu_custom_call.1} parent=1 // pred_region
      _
    $region17: #{tpu_custom_call.1} parent=1 // pred_fallthru
      _
    // Predicated region
    $region18: #{tpu_custom_call.1} parent=1 // pred_check
      _
    $region19: #{tpu_custom_call.1} parent=1 // pred_check_branch
      %42 = sbr.rel (0) target = $region21
    $region20: #{tpu_custom_call.1} parent=1 // pred_region
      %44 = vsyncadd [#allocation6], 0
      %s46 = sshll.u32 %s4, 4
      %s47 = int_to_ptr.hbm [resolvable:$true] %s46
      %s48 = sshll.u32 [#allocation7], 4
      %s49 = int_to_ptr.vmem [resolvable:$true] %s48
      %51 = dma.hbm_to_vmem [thread:$0]  %s47, 16, %s49, [#allocation6]
    $region21: #{tpu_custom_call.1} parent=1 // pred_fallthru
      _
    // Predicated region
    $region22: #{tpu_custom_call.1} parent=1 // pred_check
      _
    $region23: #{tpu_custom_call.1} parent=1 // pred_check_branch
      %53 = sbr.rel (0) target = $region25
    $region24: #{tpu_custom_call.1} parent=1 // pred_region
      _
    $region25: #{tpu_custom_call.1} parent=1 // pred_fallthru
      _
    // Predicated region
    $region26: #{tpu_custom_call.1} parent=1 // pred_check
      _
    $region27: #{tpu_custom_call.1} parent=1 // pred_check_branch
      %55 = sbr.rel (0) target = $region29
    $region28: #{tpu_custom_call.1} parent=1 // pred_region
      _
    $region29: #{tpu_custom_call.1} parent=1 // pred_fallthru
      _
    // Predicated region
    $region30: #{tpu_custom_call.1} parent=1 // pred_check
      _
    $region31: #{tpu_custom_call.1} parent=1 // pred_check_branch
      %57 = sbr.rel (0) target = $region33
    $region32: #{tpu_custom_call.1} parent=1 // pred_region
      %59 = dma.done [#allocation3], 128
    $region33: #{tpu_custom_call.1} parent=1 // pred_fallthru
      _
    // Predicated region
    $region34: #{tpu_custom_call.1} parent=1 // pred_check
      _
    $region35: #{tpu_custom_call.1} parent=1 // pred_check_branch
      %61 = sbr.rel (0) target = $region37
    $region36: #{tpu_custom_call.1} parent=1 // pred_region
      %63 = dma.done [#allocation6], 128
    $region37: #{tpu_custom_call.1} parent=1 // pred_fallthru
      _
    // Predicated region
    $region38: #{tpu_custom_call.1} parent=1 // pred_check
      _
    $region39: #{tpu_custom_call.1} parent=1 // pred_check_branch
      %65 = sbr.rel (0) target = $region41
    $region40: #{tpu_custom_call.1} parent=1 // pred_region
      %67 = dma.done [#allocation6], 16
    $region41: #{tpu_custom_call.1} parent=1 // pred_fallthru
      _
    %v69 = vld [vmem:[#allocation2] sm:$0xff]
    %v70 = vpack.c.bf16 %v69, %v69
    %v71 = vld [vmem:[%s2] sm:$0xf]
    %v72 = vld [vmem:[%s2 + $0x4] sm:$0xf]
    %v73 = vld [vmem:[%s2 + $0x8] sm:$0xf]
    %v74 = vld [vmem:[%s2 + $0xc] sm:$0xf]
    %v75 = vld [vmem:[#allocation5] sm:$0xff]
    %v76 = vpack.c.bf16 %v75, %v75
    %v77 = vld [vmem:[%s3] sm:$0xf]
    %v78 = vld [vmem:[%s3 + $0x4] sm:$0xf]
    %v79 = vld [vmem:[%s3 + $0x8] sm:$0xf]
    %v80 = vld [vmem:[%s3 + $0xc] sm:$0xf]
    %v85 = vunpack.c.l.b16 %v77
    %v86 = vunpack.c.l.b16 %v78
    %v87 = vunpack.c.l.b16 %v79
    %v88 = vunpack.c.l.b16 %v80
    %v89 = vpack.c.b16 %v86, %v85
    %v90 = vpack.c.b16 %v88, %v87
    %vm93 = vcmask 261120
    %v95 = vsel %vm93, %v76, 0
    %97 = vmatpush.bf16.msra.mxu0 0
    %98 = vmatpush.bf16.msra.mxu0 0
    %99 = vmatpush.bf16.msra.mxu0 0
    %100 = vmatpush.bf16.msra.mxu0 0
    %101 = vmatpush.bf16.msra.mxu0 0
    %102 = vmatpush.bf16.msra.mxu0 0
    %103 = vmatpush.bf16.msra.mxu0 %v90
    %104 = vmatpush.bf16.msra.mxu0 %v89
    %105 = vmatmul.bf16.gmra.mxu0 %v95
    %v106 = vpop.f32.mrf.mxu0
    %v107 = vadd.f32 0.0, %v106
    %v108 = vpop.f32.mrf.mxu0
    %109 = vdwg.mxu0
    %v114 = vunpack.c.l.b16 %v71
    %v115 = vunpack.c.l.b16 %v72
    %v116 = vunpack.c.l.b16 %v73
    %v117 = vunpack.c.l.b16 %v74
    %v118 = vpack.c.b16 %v115, %v114
    %v119 = vpack.c.b16 %v117, %v116
    %v123 = vsel %vm93, %v70, 0
    %125 = vmatpush.bf16.msra.mxu0 0
    %126 = vmatpush.bf16.msra.mxu0 0
    %127 = vmatpush.bf16.msra.mxu0 0
    %128 = vmatpush.bf16.msra.mxu0 0
    %129 = vmatpush.bf16.msra.mxu0 0
    %130 = vmatpush.bf16.msra.mxu0 0
    %131 = vmatpush.bf16.msra.mxu0 %v119
    %132 = vmatpush.bf16.msra.mxu0 %v118
    %133 = vmatmul.bf16.gmra.mxu0 %v123
    %v134 = vpop.f32.mrf.mxu0
    %v135 = vadd.f32 %v107, %v134
    %v136 = vpop.f32.mrf.mxu0
    %137 = vdwg.mxu0
    %v138 = vld [vmem:[#allocation7] sm:$0x1]
    %v140 = vperm.slane %v138, 0
    %v142 = vadd.f32 %v135, %v140
    %v143 = vld [vmem:[%s5] sm:$0xff]
    %v144 = vld [vmem:[%s5 + $0x8] sm:$0xff]
    %v145 = vld [vmem:[%s5 + $0x10] sm:$0xff]
    %v146 = vld [vmem:[%s5 + $0x18] sm:$0xff]
    %v148 = vsel %vm93, %v142, 0
    %150 = vmatpush.msra.mxu0 0.0
    %151 = vmatpush.msra.mxu0 0.0
    %152 = vmatpush.msra.mxu0 0.0
    %153 = vmatpush.msra.mxu0 0.0
    %154 = vmatpush.msra.mxu0 0.0
    %155 = vmatpush.msra.mxu0 0.0
    %156 = vmatpush.msra.mxu0 0.0
    %157 = vmatpush.msra.mxu0 0.0
    %158 = vmatpush.msra.mxu0 0.0
    %159 = vmatpush.msra.mxu0 0.0
    %160 = vmatpush.msra.mxu0 0.0
    %161 = vmatpush.msra.mxu0 0.0
    %162 = vmatpush.msra.mxu0 %v146
    %163 = vmatpush.msra.mxu0 %v145
    %164 = vmatpush.msra.mxu0 %v144
    %165 = vmatpush.msra.mxu0 %v143
    %166 = vmatmul.f32.gmra.mxu0 %v148
    %v167 = vpop.f32.mrf.mxu0
    %v168 = vadd.f32 0.0, %v167
    %169 = vdwg.mxu0
    %v170 = vmax.f32 %v168, 0.0
    %v171 = vld [vmem:[%s6] sm:$0xf]
    %vm172 = vcmask 31744
    %v174 = vsel %vm172, %v170, 0
    %vm176 = vcmask 1043456
    %v178 = vsel %vm176, %v171, 0
    %180 = vmatpush.msra.mxu0 0.0
    %181 = vmatpush.msra.mxu0 0.0
    %182 = vmatpush.msra.mxu0 0.0
    %183 = vmatpush.msra.mxu0 0.0
    %184 = vmatpush.msra.mxu0 0.0
    %185 = vmatpush.msra.mxu0 0.0
    %186 = vmatpush.msra.mxu0 0.0
    %187 = vmatpush.msra.mxu0 0.0
    %188 = vmatpush.msra.mxu0 0.0
    %189 = vmatpush.msra.mxu0 0.0
    %190 = vmatpush.msra.mxu0 0.0
    %191 = vmatpush.msra.mxu0 0.0
    %192 = vmatpush.msra.mxu0 0.0
    %193 = vmatpush.msra.mxu0 0.0
    %194 = vmatpush.msra.mxu0 0.0
    %195 = vmatpush.msra.mxu0 %v178
    %196 = vmatmul.f32.gmra.mxu0 %v174
    %v197 = vpop.f32.mrf.mxu0
    %v198 = vadd.f32 0.0, %v197
    %199 = vdwg.mxu0
    %v200 = vxor.u32 %v198, 2147483648
    %v201 = vmul.f32 %v200, 1.442695
    %v202 = vpow.pop %v201
    %v203 = vadd.f32 %v202, 1.0
    %v204 = vrcp.pop %v203
    %v205 = vmul.f32 %v203, %v204
    %v206 = vsub.f32 1.0, %v205
    %v207 = vmul.f32 %v204, %v206
    %v208 = vadd.f32 %v204, %v207
    %vm209 = vweird.f32 %v203
    %vm210 = vweird.f32 %v204
    %vm211 = vmor %vm209, %vm210
    %v212 = vsel %vm211, %v204, %v208
    %v213 = vand.u32 2147483647, %v203
    %vm214 = vcmp.eq.f32.partialorder %v213, 8.507059e+37
    %v215 = vand.u32 %v203, 2147483648
    %v216 = vor.u32 1.1754944e-38, %v215
    %v217 = vsel %vm214, %v216, %v212
    %v218 = vmul.f32 1.0, %v217
    %v219 = vmul.f32 %v142, %v218
    %v220 = vpack.c.bf16 %v219, %v219
    %vm221 = vcmask 257024
    %222 = vst.msk [vmem:[#allocation8] sm:$0xf] %vm221, %v220
    // Predicated region
    $region42: #{tpu_custom_call.1} parent=1 // pred_check
      _
    $region43: #{tpu_custom_call.1} parent=1 // pred_check_branch
      %224 = sbr.rel (0) target = $region45
    $region44: #{tpu_custom_call.1} parent=1 // pred_region
      %226 = vsyncadd [#allocation4], 0
      %s228 = sshll.u32 [#allocation8], 4
      %s229 = int_to_ptr.vmem [resolvable:$true] %s228
      %s230 = sshll.u32 %s7, 4
      %s231 = int_to_ptr.hbm [resolvable:$true] %s230
      %233 = dma.vmem_to_hbm [thread:$0]  %s229, 64, %s231, [#allocation4]
    $region45: #{tpu_custom_call.1} parent=1 // pred_fallthru
      _
    // Predicated region
    $region46: #{tpu_custom_call.1} parent=1 // pred_check
      _
    $region47: #{tpu_custom_call.1} parent=1 // pred_check_branch
      %235 = sbr.rel (0) target = $region49
    $region48: #{tpu_custom_call.1} parent=1 // pred_region
      %237 = dma.done [#allocation4], 64
    $region49: #{tpu_custom_call.1} parent=1 // pred_fallthru
      _
    %238 = vsyncpa [#allocation3], 1
    %239 = vsyncpa [#allocation6], 1
    %240 = vsyncpa [#allocation4], 1

// kernel: tpu_custom_call.1
$region0: #{tpu_custom_call.1}
  #allocation0 [shape = 'u32[]', space=smem, size = 0x4, offset = 0x4, fixed_abs, tag = 'smem constant byte address 0x4 - core index']
  #allocation1 [shape = 'u32[72,128]{1,0:T(1,128)}', space=vmem, size = 0x9000, scoped, tag = 'internal scratch']
  %s0 = inlined_call_operand.hbm [shape: f32[8,32], index: 0, kind: input, shape index: {}]
  %s1 = inlined_call_operand.hbm [shape: f32[8,32], index: 1, kind: input, shape index: {}]
  %s2 = inlined_call_operand.vmem [shape: bf16[32,32], index: 2, kind: input, shape index: {}]
  %s3 = inlined_call_operand.vmem [shape: bf16[32,32], index: 3, kind: input, shape index: {}]
  %s4 = inlined_call_operand.hbm [shape: f32[1,32], index: 4, kind: input, shape index: {}]
  %s5 = inlined_call_operand.vmem [shape: f32[32,4], index: 5, kind: input, shape index: {}]
  %s6 = inlined_call_operand.vmem [shape: f32[4,32], index: 6, kind: input, shape index: {}]
  %s7 = inlined_call_operand.hbm [shape: bf16[8,32], index: 7, kind: output, shape index: {}]
  %s8 = sld [smem:[#allocation0]]
  $region50: #{tpu_custom_call.1} parent=0
    _
  %s10 = ssub.s32 1, %s8
  %s11 = scalar_select 0, %s10, %s8
  $region1: #{tpu_custom_call.1} parent=0
    #allocation2 [shape = 'u8[4096]{0}', space=vmem, size = 0x1000, scoped, tag = 'input window, operand 0, single buffered']
    #allocation3 [shape = 's32[1]{0}', space=sflag, size = 0x4, scoped, tag = 'scoped memory for tpu_custom_call.1']
    #allocation4 [shape = 's32[1]{0}', space=sflag, size = 0x4, scoped, tag = 'scoped memory for tpu_custom_call.1']
    #allocation5 [shape = 'u8[4096]{0}', space=vmem, size = 0x1000, scoped, tag = 'input window, operand 1, single buffered']
    #allocation6 [shape = 's32[1]{0}', space=sflag, size = 0x4, scoped, tag = 'scoped memory for tpu_custom_call.1']
    #allocation7 [shape = 'u8[512]{0}', space=vmem, size = 0x400, scoped, tag = 'input window, operand 4, single buffered']
    #allocation8 [shape = 'u8[2048]{0}', space=vmem, size = 0x800, scoped, tag = 'output window, operand 0, single buffered']
    %12 = vsyncpa [#allocation3], 0
    %13 = vsyncpa [#allocation6], 0
    %14 = vsyncpa [#allocation4], 0
    // Predicated region
    $region2: #{tpu_custom_call.1} parent=1 // pred_check
      _
    $region3: #{tpu_custom_call.1} parent=1 // pred_check_branch
      %16 = sbr.rel (0) target = $region5
    $region4: #{tpu_custom_call.1} parent=1 // pred_region
      %18 = vsyncadd [#allocation3], 0
      %s20 = sshll.u32 %s0, 4
      %s21 = int_to_ptr.hbm [resolvable:$true] %s20
      %s22 = sshll.u32 [#allocation2], 4
      %s23 = int_to_ptr.vmem [resolvable:$true] %s22
      %25 = dma.hbm_to_vmem [thread:$0]  %s21, 128, %s23, [#allocation3]
    $region5: #{tpu_custom_call.1} parent=1 // pred_fallthru
      _
    // Predicated region
    $region6: #{tpu_custom_call.1} parent=1 // pred_check
      _
    $region7: #{tpu_custom_call.1} parent=1 // pred_check_branch
      %27 = sbr.rel (0) target = $region9
    $region8: #{tpu_custom_call.1} parent=1 // pred_region
      %29 = vsyncadd [#allocation6], 0
      %s31 = sshll.u32 %s1, 4
      %s32 = int_to_ptr.hbm [resolvable:$true] %s31
      %s33 = sshll.u32 [#allocation5], 4
      %s34 = int_to_ptr.vmem [resolvable:$true] %s33
      %36 = dma.hbm_to_vmem [thread:$0]  %s32, 128, %s34, [#allocation6]
    $region9: #{tpu_custom_call.1} parent=1 // pred_fallthru
      _
    // Predicated region
    $region10: #{tpu_custom_call.1} parent=1 // pred_check
      _
    $region11: #{tpu_custom_call.1} parent=1 // pred_check_branch
      %38 = sbr.rel (0) target = $region13
    $region12: #{tpu_custom_call.1} parent=1 // pred_region
      _
    $region13: #{tpu_custom_call.1} parent=1 // pred_fallthru
      _
    // Predicated region
    $region14: #{tpu_custom_call.1} parent=1 // pred_check
      _
    $region15: #{tpu_custom_call.1} parent=1 // pred_check_branch
      %40 = sbr.rel (0) target = $region17
    $region16: #{tpu_custom_call.1} parent=1 // pred_region
      _
    $region17: #{tpu_custom_call.1} parent=1 // pred_fallthru
      _
    // Predicated region
    $region18: #{tpu_custom_call.1} parent=1 // pred_check
      _
    $region19: #{tpu_custom_call.1} parent=1 // pred_check_branch
      %42 = sbr.rel (0) target = $region21
    $region20: #{tpu_custom_call.1} parent=1 // pred_region
      %44 = vsyncadd [#allocation6], 0
      %s46 = sshll.u32 %s4, 4
      %s47 = int_to_ptr.hbm [resolvable:$true] %s46
      %s48 = sshll.u32 [#allocation7], 4
      %s49 = int_to_ptr.vmem [resolvable:$true] %s48
      %51 = dma.hbm_to_vmem [thread:$0]  %s47, 16, %s49, [#allocation6]
    $region21: #{tpu_custom_call.1} parent=1 // pred_fallthru
      _
    // Predicated region
    $region22: #{tpu_custom_call.1} parent=1 // pred_check
      _
    $region23: #{tpu_custom_call.1} parent=1 // pred_check_branch
      %53 = sbr.rel (0) target = $region25
    $region24: #{tpu_custom_call.1} parent=1 // pred_region
      _
    $region25: #{tpu_custom_call.1} parent=1 // pred_fallthru
      _
    // Predicated region
    $region26: #{tpu_custom_call.1} parent=1 // pred_check
      _
    $region27: #{tpu_custom_call.1} parent=1 // pred_check_branch
      %55 = sbr.rel (0) target = $region29
    $region28: #{tpu_custom_call.1} parent=1 // pred_region
      _
    $region29: #{tpu_custom_call.1} parent=1 // pred_fallthru
      _
    // Predicated region
    $region30: #{tpu_custom_call.1} parent=1 // pred_check
      _
    $region31: #{tpu_custom_call.1} parent=1 // pred_check_branch
      %57 = sbr.rel (0) target = $region33
    $region32: #{tpu_custom_call.1} parent=1 // pred_region
      %59 = dma.done [#allocation3], 128
    $region33: #{tpu_custom_call.1} parent=1 // pred_fallthru
      _
    // Predicated region
    $region34: #{tpu_custom_call.1} parent=1 // pred_check
      _
    $region35: #{tpu_custom_call.1} parent=1 // pred_check_branch
      %61 = sbr.rel (0) target = $region37
    $region36: #{tpu_custom_call.1} parent=1 // pred_region
      %63 = dma.done [#allocation6], 128
    $region37: #{tpu_custom_call.1} parent=1 // pred_fallthru
      _
    // Predicated region
    $region38: #{tpu_custom_call.1} parent=1 // pred_check
      _
    $region39: #{tpu_custom_call.1} parent=1 // pred_check_branch
      %65 = sbr.rel (0) target = $region41
    $region40: #{tpu_custom_call.1} parent=1 // pred_region
      %67 = dma.done [#allocation6], 16
    $region41: #{tpu_custom_call.1} parent=1 // pred_fallthru
      _
    %v69 = vld [vmem:[#allocation2] sm:$0xff]
    %v70 = vpack.c.bf16 %v69, %v69
    %v71 = vld [vmem:[%s2] sm:$0xf]
    %v72 = vld [vmem:[%s2 + $0x4] sm:$0xf]
    %v73 = vld [vmem:[%s2 + $0x8] sm:$0xf]
    %v74 = vld [vmem:[%s2 + $0xc] sm:$0xf]
    %v75 = vld [vmem:[#allocation5] sm:$0xff]
    %v76 = vpack.c.bf16 %v75, %v75
    %v77 = vld [vmem:[%s3] sm:$0xf]
    %v78 = vld [vmem:[%s3 + $0x4] sm:$0xf]
    %v79 = vld [vmem:[%s3 + $0x8] sm:$0xf]
    %v80 = vld [vmem:[%s3 + $0xc] sm:$0xf]
    %v85 = vunpack.c.l.b16 %v77
    %v86 = vunpack.c.l.b16 %v78
    %v87 = vunpack.c.l.b16 %v79
    %v88 = vunpack.c.l.b16 %v80
    %v89 = vpack.c.b16 %v86, %v85
    %v90 = vpack.c.b16 %v88, %v87
    %vm93 = vcmask 261120
    %v95 = vsel %vm93, %v76, 0
    %97 = vmatpush.bf16.msra.mxu0 0
    %98 = vmatpush.bf16.msra.mxu0 0
    %99 = vmatpush.bf16.msra.mxu0 0
    %100 = vmatpush.bf16.msra.mxu0 0
    %101 = vmatpush.bf16.msra.mxu0 0
    %102 = vmatpush.bf16.msra.mxu0 0
    %103 = vmatpush.bf16.msra.mxu0 %v90
    %104 = vmatpush.bf16.msra.mxu0 %v89
    %105 = vmatmul.bf16.gmra.mxu0 %v95
    %v106 = vpop.f32.mrf.mxu0
    %v107 = vadd.f32 0.0, %v106
    %v108 = vpop.f32.mrf.mxu0
    %109 = vdwg.mxu0
    %v114 = vunpack.c.l.b16 %v71
    %v115 = vunpack.c.l.b16 %v72
    %v116 = vunpack.c.l.b16 %v73
    %v117 = vunpack.c.l.b16 %v74
    %v118 = vpack.c.b16 %v115, %v114
    %v119 = vpack.c.b16 %v117, %v116
    %v123 = vsel %vm93, %v70, 0
    %125 = vmatpush.bf16.msra.mxu0 0
    %126 = vmatpush.bf16.msra.mxu0 0
    %127 = vmatpush.bf16.msra.mxu0 0
    %128 = vmatpush.bf16.msra.mxu0 0
    %129 = vmatpush.bf16.msra.mxu0 0
    %130 = vmatpush.bf16.msra.mxu0 0
    %131 = vmatpush.bf16.msra.mxu0 %v119
    %132 = vmatpush.bf16.msra.mxu0 %v118
    %133 = vmatmul.bf16.gmra.mxu0 %v123
    %v134 = vpop.f32.mrf.mxu0
    %v135 = vadd.f32 %v107, %v134
    %v136 = vpop.f32.mrf.mxu0
    %137 = vdwg.mxu0
    %v138 = vld [vmem:[#allocation7] sm:$0x1]
    %v140 = vperm.slane %v138, 0
    %v142 = vadd.f32 %v135, %v140
    %v143 = vld [vmem:[%s5] sm:$0xff]
    %v144 = vld [vmem:[%s5 + $0x8] sm:$0xff]
    %v145 = vld [vmem:[%s5 + $0x10] sm:$0xff]
    %v146 = vld [vmem:[%s5 + $0x18] sm:$0xff]
    %v148 = vsel %vm93, %v142, 0
    %150 = vmatpush.msra.mxu0 0.0
    %151 = vmatpush.msra.mxu0 0.0
    %152 = vmatpush.msra.mxu0 0.0
    %153 = vmatpush.msra.mxu0 0.0
    %154 = vmatpush.msra.mxu0 0.0
    %155 = vmatpush.msra.mxu0 0.0
    %156 = vmatpush.msra.mxu0 0.0
    %157 = vmatpush.msra.mxu0 0.0
    %158 = vmatpush.msra.mxu0 0.0
    %159 = vmatpush.msra.mxu0 0.0
    %160 = vmatpush.msra.mxu0 0.0
    %161 = vmatpush.msra.mxu0 0.0
    %162 = vmatpush.msra.mxu0 %v146
    %163 = vmatpush.msra.mxu0 %v145
    %164 = vmatpush.msra.mxu0 %v144
    %165 = vmatpush.msra.mxu0 %v143
    %166 = vmatmul.f32.gmra.mxu0 %v148
    %v167 = vpop.f32.mrf.mxu0
    %v168 = vadd.f32 0.0, %v167
    %169 = vdwg.mxu0
    %v170 = vmax.f32 %v168, 0.0
    %v171 = vld [vmem:[%s6] sm:$0xf]
    %vm172 = vcmask 31744
    %v174 = vsel %vm172, %v170, 0
    %vm176 = vcmask 1043456
    %v178 = vsel %vm176, %v171, 0
    %180 = vmatpush.msra.mxu0 0.0
    %181 = vmatpush.msra.mxu0 0.0
    %182 = vmatpush.msra.mxu0 0.0
    %183 = vmatpush.msra.mxu0 0.0
    %184 = vmatpush.msra.mxu0 0.0
    %185 = vmatpush.msra.mxu0 0.0
    %186 = vmatpush.msra.mxu0 0.0
    %187 = vmatpush.msra.mxu0 0.0
    %188 = vmatpush.msra.mxu0 0.0
    %189 = vmatpush.msra.mxu0 0.0
    %190 = vmatpush.msra.mxu0 0.0
    %191 = vmatpush.msra.mxu0 0.0
    %192 = vmatpush.msra.mxu0 0.0
    %193 = vmatpush.msra.mxu0 0.0
    %194 = vmatpush.msra.mxu0 0.0
    %195 = vmatpush.msra.mxu0 %v178
    %196 = vmatmul.f32.gmra.mxu0 %v174
    %v197 = vpop.f32.mrf.mxu0
    %v198 = vadd.f32 0.0, %v197
    %199 = vdwg.mxu0
    %v200 = vxor.u32 %v198, 2147483648
    %v201 = vmul.f32 %v200, 1.442695
    %v202 = vpow.pop %v201
    %v203 = vadd.f32 %v202, 1.0
    %v204 = vrcp.pop %v203
    %v205 = vmul.f32 %v203, %v204
    %v206 = vsub.f32 1.0, %v205
    %v207 = vmul.f32 %v204, %v206
    %v208 = vadd.f32 %v204, %v207
    %vm209 = vweird.f32 %v203
    %vm210 = vweird.f32 %v204
    %vm211 = vmor %vm209, %vm210
    %v212 = vsel %vm211, %v204, %v208
    %v213 = vand.u32 2147483647, %v203
    %vm214 = vcmp.eq.f32.partialorder %v213, 8.507059e+37
    %v215 = vand.u32 %v203, 2147483648
    %v216 = vor.u32 1.1754944e-38, %v215
    %v217 = vsel %vm214, %v216, %v212
    %v218 = vmul.f32 1.0, %v217
    %v219 = vmul.f32 %v142, %v218
    %v220 = vpack.c.bf16 %v219, %v219
    %vm221 = vcmask 257024
    %222 = vst.msk [vmem:[#allocation8] sm:$0xf] %vm221, %v220
    // Predicated region
    $region42: #{tpu_custom_call.1} parent=1 // pred_check
      _
    $region43: #{tpu_custom_call.1} parent=1 // pred_check_branch
      %224 = sbr.rel (0) target = $region45
    $region44: #{tpu_custom_call.1} parent=1 // pred_region
      %226 = vsyncadd [#allocation4], 0
      %s228 = sshll.u32 [#allocation8], 4
      %s229 = int_to_ptr.vmem [resolvable:$true] %s228
      %s230 = sshll.u32 %s7, 4
      %s231 = int_to_ptr.hbm [resolvable:$true] %s230
      %233 = dma.vmem_to_hbm [thread:$0]  %s229, 64, %s231, [#allocation4]
    $region45: #{tpu_custom_call.1} parent=1 // pred_fallthru
      _
    // Predicated region
    $region46: #{tpu_custom_call.1} parent=1 // pred_check
      _
    $region47: #{tpu_custom_call.1} parent=1 // pred_check_branch
      %235 = sbr.rel (0) target = $region49
    $region48: #{tpu_custom_call.1} parent=1 // pred_region
      %237 = dma.done [#allocation4], 64
    $region49: #{tpu_custom_call.1} parent=1 // pred_fallthru
      _
    %238 = vsyncpa [#allocation3], 1
    %239 = vsyncpa [#allocation6], 1
    %240 = vsyncpa [#allocation4], 1

</llo_original>
